<compile_context>
chip_gen: v7x
topology: tpu7x:2x2x1
jax: 0.10.0
libtpu: 0.0.40
codegen_flags: <defaults>
</compile_context>

<pallas_src>
import functools
import numpy as np
import jax
import jax.numpy as jnp
from jax import lax
from jax.experimental import pallas as pl
from jax.experimental.pallas import tpu as pltpu


def _expert_kernel(eids_ref, x_ref, w1_ref, b1_ref, w2_ref, o_ref,
                   *, upper_bound, th, n_kh):
    # x_ref : (TM, d_model)        w1_ref: (1, d_model, TH)
    # b1_ref: (1, 1, d_hidden)     w2_ref: (1, TH, d_model)
    # o_ref : (TM, d_model) f32, resident across the kh axis (accumulator)
    kh = pl.program_id(1)

    x = x_ref[...]                                   # (TM, d_model)
    w1 = w1_ref[0]                                   # (d_model, TH)
    w2 = w2_ref[0]                                   # (TH, d_model)
    start = pl.multiple_of(kh * th, th)
    b1 = b1_ref[0, :, pl.ds(start, th)]              # (1, TH) — slice of the full bias

    # hidden tile: h = relu(x @ W1_tile + b1_tile), optional clamp.
    # (hidden units are independent, so the nonlinearity is exact per tile)
    h = lax.dot_general(x, w1, (((1,), (0,)), ((), ())),
                        preferred_element_type=jnp.float32)
    h = jnp.maximum(h + b1, 0.0)
    if upper_bound is not None:
        h = jnp.minimum(h, jnp.float32(upper_bound))
    # dropout(p=0.0) / eval mode -> identity

    partial = lax.dot_general(h.astype(w2.dtype), w2,
                              (((1,), (0,)), ((), ())),
                              preferred_element_type=jnp.float32)

    if n_kh == 1:
        o_ref[...] = partial
    else:
        @pl.when(kh == 0)
        def _first():
            o_ref[...] = partial

        @pl.when(kh > 0)
        def _accum():
            o_ref[...] += partial


def _expert_pallas(expert_ids, x_slab, w1t, b1r, w2t, *,
                   upper_bound, tm, th, vmem_limit_bytes):
    T_pad, d_model = x_slab.shape
    d_hidden = w1t.shape[2]
    n_kh = d_hidden // th
    total_tiles = T_pad // tm

    kernel = functools.partial(_expert_kernel, upper_bound=upper_bound,
                               th=th, n_kh=n_kh)
    return pl.pallas_call(
        kernel,
        # f32 output = accumulator; caller casts back after the un-pack gather.
        out_shape=jax.ShapeDtypeStruct((T_pad, d_model), jnp.float32),
        grid_spec=pltpu.PrefetchScalarGridSpec(
            num_scalar_prefetch=1,
            grid=(total_tiles, n_kh),
            in_specs=[
                # token slab tile: resident across kh
                pl.BlockSpec((tm, d_model), lambda t, kh, eids: (t, 0)),
                # W1^T tile: expert chosen via prefetched tile->expert map
                pl.BlockSpec((1, d_model, th), lambda t, kh, eids: (eids[t], 0, kh)),
                # full per-expert bias, fetched once per token tile
                pl.BlockSpec((1, 1, d_hidden), lambda t, kh, eids: (eids[t], 0, 0)),
                # W2^T tile
                pl.BlockSpec((1, th, d_model), lambda t, kh, eids: (eids[t], kh, 0)),
            ],
            out_specs=pl.BlockSpec((tm, d_model), lambda t, kh, eids: (t, 0)),
        ),
        compiler_params=pltpu.CompilerParams(
            dimension_semantics=("parallel", "arbitrary"),
            vmem_limit_bytes=vmem_limit_bytes,
        ),
    )(expert_ids, x_slab, w1t, b1r, w2t)


def expert_forward(inp, fwd_expert_count, w1, b1, w2,
                   upper_bound=None, capacity=-1,
                   tm=512, th=None, compute_dtype=jnp.bfloat16):
    """Pallas-backed Expert.forward.

    inp: (T, d_model) tokens sorted by expert; fwd_expert_count: host ints (E,).
    w1: (E, d_hidden, d_model), b1: (E, d_hidden), w2: (E, d_model, d_hidden).
    compute_dtype=None keeps f32 operands on the MXU (slower); default bf16
    keeps f32 accumulation inside the kernel.
    """
    # TODO(synk): positive `capacity` truncation (FMoE capacity mode) and dropout p>0 not implemented.
    # TODO(synk): input packing gather could be removed with pl.Element row offsets; kept for simplicity.
    E, d_hidden, d_model = w1.shape
    counts = [int(c) for c in np.asarray(fwd_expert_count)]
    T = int(inp.shape[0])
    assert len(counts) == E and sum(counts) == T
    assert d_model % 128 == 0, "d_model must be lane aligned (multiple of 128)"

    out_dtype = inp.dtype
    if compute_dtype is not None:
        # bf16 MXU fast path: cast activations + weights, keep f32 bias & accumulation.
        inp = inp.astype(compute_dtype)
        w1 = w1.astype(compute_dtype)
        w2 = w2.astype(compute_dtype)

    isz = int(jnp.dtype(inp.dtype).itemsize)
    sub = max(8, 32 // isz)          # sublane granularity for the packed dtype
    assert tm % sub == 0, f"token tile must be a multiple of {sub} for dtype {inp.dtype}"

    # hidden tile: prefer >=256 (512) so the second GEMM fills the MXU
    if th is None:
        if d_hidden <= 512:
            th = d_hidden
        elif d_hidden % 512 == 0:
            th = 512
        elif d_hidden % 256 == 0:
            th = 256
        elif d_hidden % 128 == 0:
            th = 128
        else:
            th = d_hidden
    if th >= d_hidden:
        th = d_hidden
    else:
        assert th % 128 == 0 and d_hidden % th == 0, \
            "hidden tile must be lane aligned and divide d_hidden"

    # generation-aware VMEM budget (v7x has 64 MiB physical, v5e/v6e 128 MiB)
    try:
        vmem_cap = int(pltpu.get_tpu_info().vmem_capacity_bytes)
    except Exception:
        vmem_cap = 64 * 1024 * 1024
    vmem_budget = vmem_cap - (8 << 20)

    def _working_set(tm_):
        ins = (tm_ * d_model + d_model * th + th * d_model) * isz + d_hidden * 4
        out = tm_ * d_model * 4
        return 2 * (ins + out)       # double-buffered blocks

    while _working_set(tm) + (2 << 20) > vmem_budget and tm > 2 * sub:
        tm //= 2
    tm = max(sub, (tm // sub) * sub)

    # tile-aligned grouped layout (empty experts contribute zero tiles)
    tiles = [(c + tm - 1) // tm for c in counts]
    total_tiles = int(sum(tiles))
    if total_tiles == 0:
        return jnp.zeros((0, d_model), out_dtype)
    T_pad = total_tiles * tm

    offs = np.concatenate([[0], np.cumsum(counts)]).astype(np.int64)
    pad_offs = np.concatenate([[0], np.cumsum([n * tm for n in tiles])]).astype(np.int64)

    expert_ids = np.zeros((total_tiles,), np.int32)   # tile -> expert (SMEM prefetch)
    src = np.full((T_pad,), T, np.int32)              # slab row -> token (T = zero pad row)
    dst = np.zeros((T,), np.int32)                    # token -> slab row
    tile_pos = 0
    for e in range(E):
        if tiles[e] > 0:
            expert_ids[tile_pos:tile_pos + tiles[e]] = e
            tile_pos += tiles[e]
        c = counts[e]
        if c > 0:
            src[pad_offs[e]:pad_offs[e] + c] = np.arange(offs[e], offs[e] + c)
            dst[offs[e]:offs[e] + c] = np.arange(pad_offs[e], pad_offs[e] + c)

    # single gather packs tokens into the tile-aligned slab
    inp_ext = jnp.concatenate([inp, jnp.zeros((1, d_model), inp.dtype)], axis=0)
    x_slab = jnp.take(inp_ext, jnp.asarray(src), axis=0)

    # pre-transpose weights once so both contractions are plain (M,K)x(K,N)
    w1t = jnp.transpose(w1, (0, 2, 1))                # (E, d_model, d_hidden)
    w2t = jnp.transpose(w2, (0, 2, 1))                # (E, d_hidden, d_model)
    b1r = b1.astype(jnp.float32).reshape(E, 1, d_hidden)

    vmem_limit = int(min(max(_working_set(tm) + (4 << 20), 32 << 20), vmem_budget))

    out_slab = _expert_pallas(jnp.asarray(expert_ids), x_slab, w1t, b1r, w2t,
                              upper_bound=upper_bound, tm=tm, th=th,
                              vmem_limit_bytes=vmem_limit)

    # single gather pulls real tokens back out of the slab (padding rows dropped);
    # cast to the caller's dtype only after accumulation in f32.
    return jnp.take(out_slab, jnp.asarray(dst), axis=0).astype(out_dtype)


def _init_params(key, num_experts, d_model, d_hidden, dtype=jnp.float32):
    # deterministic kaiming-uniform-ish init (matches FMoELinear shapes)
    k1, k2, k3 = jax.random.split(key, 3)
    lim1 = float(np.sqrt(1.0 / d_model))
    lim2 = float(np.sqrt(1.0 / d_hidden))
    w1 = jax.random.uniform(k1, (num_experts, d_hidden, d_model), dtype, -lim1, lim1)
    b1 = jax.random.uniform(k2, (num_experts, d_hidden), dtype, -lim1, lim1)
    w2 = jax.random.uniform(k3, (num_experts, d_model, d_hidden), dtype, -lim2, lim2)
    return w1, b1, w2


def _reference(inp, counts, w1, b1, w2, upper_bound):
    # pure-JAX reference of Expert.forward for verification
    outs = []
    off = 0
    for e, c in enumerate(counts):
        if c == 0:
            continue
        x = inp[off:off + c]
        h = x @ w1[e].T + b1[e]
        h = jnp.maximum(h, 0.0)
        if upper_bound is not None:
            h = jnp.minimum(h, upper_bound)
        outs.append(h @ w2[e].T)
        off += c
    return jnp.concatenate(outs, axis=0)


if __name__ == "__main__":
    num_experts, d_model, d_hidden = 4, 256, 512
    upper_bound = 6.0            # exercises the clamp branch; dropout=0.0 -> identity

    key = jax.random.PRNGKey(0)
    kp, kx = jax.random.split(key)
    w1, b1, w2 = _init_params(kp, num_experts, d_model, d_hidden)

    # tokens sorted by expert; uneven counts, incl. an empty expert and one
    # expert spanning multiple token tiles (tm=128 -> tiles [1, 2, 0, 2])
    counts = [96, 160, 0, 256]
    T = sum(counts)
    inp = jax.random.normal(kx, (T, d_model), jnp.float32)
    ref = _reference(inp, counts, w1, b1, w2, upper_bound)

    # exact f32 compute path (n_kh = 2 exercises the in-place o_ref accumulation)
    out_f32 = expert_forward(inp, counts, w1, b1, w2,
                             upper_bound=upper_bound, tm=128, th=256,
                             compute_dtype=None)
    out_f32 = jax.block_until_ready(out_f32)
    np.testing.assert_allclose(np.asarray(out_f32), np.asarray(ref),
                               rtol=1e-5, atol=1e-5)
    assert out_f32.shape == (T, d_model)

    # default bf16 MXU fast path with f32 accumulation (default tm/th)
    out_bf16 = expert_forward(inp, counts, w1, b1, w2, upper_bound=upper_bound)
    out_bf16 = jax.block_until_ready(out_bf16)
    assert out_bf16.shape == (T, d_model)
    assert out_bf16.dtype == inp.dtype
    np.testing.assert_allclose(np.asarray(out_bf16), np.asarray(ref),
                               rtol=5e-2, atol=5e-2)

    print("KERNEL_OK")
</pallas_src>

<mosaic_0001>
module attributes {stable_mosaic.version = 11 : i64} {
  func.func @_expert_kernel(%arg0: i32, %arg1: i32, %arg2: memref<5xi32, #tpu.memory_space<smem>>, %arg3: memref<128x256xf32, #tpu.memory_space<vmem>>, %arg4: memref<1x256x256xf32, #tpu.memory_space<vmem>>, %arg5: memref<1x1x512xf32, #tpu.memory_space<vmem>>, %arg6: memref<1x256x256xf32, #tpu.memory_space<vmem>>, %arg7: memref<128x256xf32, #tpu.memory_space<vmem>>) attributes {dimension_semantics = [#tpu.dimension_semantics<parallel>, #tpu.dimension_semantics<arbitrary>], iteration_bounds = array<i64: 5, 2>, scalar_prefetch = 1 : i64, scratch_operands = 0 : i64, tpu.core_type = #tpu.core_type<tc>, window_params = [{transform_indices = @transform_0, window_bounds = array<i64: 128, 256>}, {transform_indices = @transform_1, window_bounds = array<i64: 1, 256, 256>}, {transform_indices = @transform_2, window_bounds = array<i64: 1, 1, 512>}, {transform_indices = @transform_3, window_bounds = array<i64: 1, 256, 256>}, {transform_indices = @transform_4, window_bounds = array<i64: 128, 256>}]} {
    %c0 = arith.constant 0 : index
    %c0_0 = arith.constant 0 : index
    %0 = vector.load %arg3[%c0, %c0_0] : memref<128x256xf32, #tpu.memory_space<vmem>>, vector<128x256xf32>
    %c0_1 = arith.constant 0 : index
    %c0_2 = arith.constant 0 : index
    %c0_3 = arith.constant 0 : index
    %1 = vector.load %arg4[%c0_1, %c0_2, %c0_3] : memref<1x256x256xf32, #tpu.memory_space<vmem>>, vector<1x256x256xf32>
    %2 = vector.shape_cast %1 : vector<1x256x256xf32> to vector<256x256xf32>
    %c0_4 = arith.constant 0 : index
    %c0_5 = arith.constant 0 : index
    %c0_6 = arith.constant 0 : index
    %3 = vector.load %arg6[%c0_4, %c0_5, %c0_6] : memref<1x256x256xf32, #tpu.memory_space<vmem>>, vector<1x256x256xf32>
    %4 = vector.shape_cast %3 : vector<1x256x256xf32> to vector<256x256xf32>
    %c256_i32 = arith.constant 256 : i32
    %5 = arith.muli %arg1, %c256_i32 : i32
    %6 = tpu.assume_multiple %5, 256 : i32
    %c0_7 = arith.constant 0 : index
    %c0_8 = arith.constant 0 : index
    %7 = arith.index_cast %6 : i32 to index
    %8 = vector.load %arg5[%c0_7, %c0_8, %7] : memref<1x1x512xf32, #tpu.memory_space<vmem>>, vector<1x1x256xf32>
    %9 = vector.shape_cast %8 : vector<1x1x256xf32> to vector<1x256xf32>
    %cst = arith.constant dense<0.000000e+00> : vector<128x256xf32>
    %10 = tpu.matmul %0, %2, %cst {dimension_numbers = #tpu.dot_dimension_numbers<[1], [0], [0], [1], [0, 0, 1, 1], [], []>} : vector<128x256xf32>, vector<256x256xf32>, vector<128x256xf32> -> vector<128x256xf32>
    %11 = vector.broadcast %9 : vector<1x256xf32> to vector<128x256xf32>
    %12 = arith.addf %10, %11 : vector<128x256xf32>
    %cst_9 = arith.constant 0.000000e+00 : f32
    %13 = vector.broadcast %cst_9 : f32 to vector<128x256xf32>
    %14 = arith.maximumf %12, %13 : vector<128x256xf32>
    %cst_10 = arith.constant 6.000000e+00 : f32
    %15 = vector.broadcast %cst_10 : f32 to vector<128x256xf32>
    %16 = arith.minimumf %14, %15 : vector<128x256xf32>
    %cst_11 = arith.constant dense<0.000000e+00> : vector<128x256xf32>
    %17 = tpu.matmul %16, %4, %cst_11 {dimension_numbers = #tpu.dot_dimension_numbers<[1], [0], [0], [1], [0, 0, 1, 1], [], []>} : vector<128x256xf32>, vector<256x256xf32>, vector<128x256xf32> -> vector<128x256xf32>
    %c0_i32 = arith.constant 0 : i32
    %18 = arith.cmpi eq, %arg1, %c0_i32 : i32
    %19 = arith.extui %18 : i1 to i32
    %c0_i32_12 = arith.constant 0 : i32
    %20 = arith.cmpi ne, %19, %c0_i32_12 : i32
    scf.if %20 {
      %c0_15 = arith.constant 0 : index
      %c0_16 = arith.constant 0 : index
      %24 = vector.load %arg7[%c0_15, %c0_16] : memref<128x256xf32, #tpu.memory_space<vmem>>, vector<128x256xf32>
      tpu.vector_store %arg7[%c0_15, %c0_16], %17 {strides = array<i32>} : memref<128x256xf32, #tpu.memory_space<vmem>>, vector<128x256xf32>,
    } else {
    }
    %c0_i32_13 = arith.constant 0 : i32
    %21 = arith.cmpi sgt, %arg1, %c0_i32_13 : i32
    %22 = arith.extui %21 : i1 to i32
    %c0_i32_14 = arith.constant 0 : i32
    %23 = arith.cmpi ne, %22, %c0_i32_14 : i32
    scf.if %23 {
      %c0_15 = arith.constant 0 : index
      %c0_16 = arith.constant 0 : index
      %24 = vector.load %arg7[%c0_15, %c0_16] : memref<128x256xf32, #tpu.memory_space<vmem>>, vector<128x256xf32>
      %25 = arith.addf %24, %17 : vector<128x256xf32>
      %c0_17 = arith.constant 0 : index
      %c0_18 = arith.constant 0 : index
      %26 = vector.load %arg7[%c0_17, %c0_18] : memref<128x256xf32, #tpu.memory_space<vmem>>, vector<128x256xf32>
      tpu.vector_store %arg7[%c0_17, %c0_18], %25 {strides = array<i32>} : memref<128x256xf32, #tpu.memory_space<vmem>>, vector<128x256xf32>,
    } else {
    }
    return
  }
  func.func @transform_0(%arg0: i32, %arg1: i32, %arg2: memref<5xi32, #tpu.memory_space<smem>>) -> (i32, i32) {
    %c0_i32 = arith.constant 0 : i32
    %c0_i32_0 = arith.constant 0 : i32
    return %arg0, %c0_i32 : i32, i32
  }
  func.func @transform_1(%arg0: i32, %arg1: i32, %arg2: memref<5xi32, #tpu.memory_space<smem>>) -> (i32, i32, i32) {
    %0 = arith.index_cast %arg0 : i32 to index
    %1 = memref.load %arg2[%0] : memref<5xi32, #tpu.memory_space<smem>>
    %c0_i32 = arith.constant 0 : i32
    %c0_i32_0 = arith.constant 0 : i32
    return %1, %c0_i32, %arg1 : i32, i32, i32
  }
  func.func @transform_2(%arg0: i32, %arg1: i32, %arg2: memref<5xi32, #tpu.memory_space<smem>>) -> (i32, i32, i32) {
    %0 = arith.index_cast %arg0 : i32 to index
    %1 = memref.load %arg2[%0] : memref<5xi32, #tpu.memory_space<smem>>
    %c0_i32 = arith.constant 0 : i32
    %c0_i32_0 = arith.constant 0 : i32
    %c0_i32_1 = arith.constant 0 : i32
    return %1, %c0_i32, %c0_i32_0 : i32, i32, i32
  }
  func.func @transform_3(%arg0: i32, %arg1: i32, %arg2: memref<5xi32, #tpu.memory_space<smem>>) -> (i32, i32, i32) {
    %0 = arith.index_cast %arg0 : i32 to index
    %1 = memref.load %arg2[%0] : memref<5xi32, #tpu.memory_space<smem>>
    %c0_i32 = arith.constant 0 : i32
    %c0_i32_0 = arith.constant 0 : i32
    return %1, %arg1, %c0_i32 : i32, i32, i32
  }
  func.func @transform_4(%arg0: i32, %arg1: i32, %arg2: memref<5xi32, #tpu.memory_space<smem>>) -> (i32, i32) {
    %c0_i32 = arith.constant 0 : i32
    %c0_i32_0 = arith.constant 0 : i32
    return %arg0, %c0_i32 : i32, i32
  }
}

</mosaic_0001>

<llo_original>
// kernel: tpu_custom_call.1
$region0: #{tpu_custom_call.1}
  #allocation0 [shape = 'u32[]', space=smem, size = 0x4, offset = 0x4, fixed_abs, tag = 'smem constant byte address 0x4 - core index']
  #allocation1 [shape = 'u32[144,128]{1,0:T(1,128)}', space=vmem, size = 0x12000, scoped, tag = 'internal scratch']
  #allocation2 [shape = 's32[1]{0}', space=sflag, size = 0x4, scoped, tag = 'scoped memory for tpu_custom_call.1']
  #allocation3 [shape = 'u8[512]{0}', space=smem, size = 0x200, scoped, tag = 'prefetched SMEM operand 0']
  %s0 = inlined_call_operand.hbm [shape: s32[5], index: 0, kind: input, shape index: {}]
  %s1 = inlined_call_operand.hbm [shape: f32[640,256], index: 1, kind: input, shape index: {}]
  %s2 = inlined_call_operand.hbm [shape: f32[4,256,512], index: 2, kind: input, shape index: {}]
  %s3 = inlined_call_operand.hbm [shape: f32[4,1,512], index: 3, kind: input, shape index: {}]
  %s4 = inlined_call_operand.hbm [shape: f32[4,512,256], index: 4, kind: input, shape index: {}]
  %s5 = inlined_call_operand.hbm [shape: f32[640,256], index: 5, kind: output, shape index: {}]
  %s6 = sld [smem:[#allocation0]]
  $region73: #{tpu_custom_call.1} parent=0
    _
  %s8 = ssub.s32 1, %s6
  %s9 = scalar_select 0, %s8, %s6
  %11 = dma.hbm_to_smem %s0, 16, [#allocation3], [#allocation2]
  %12 = dma.done [#allocation2], 16
  %13 = sfence
  $region1: #{tpu_custom_call.1} parent=0
    #allocation4 [shape = 'u8[262144]{0}', space=vmem, size = 0x40000, scoped, tag = 'input window, operand 1']
    #allocation5 [shape = 's32[2]{0}', space=sflag, size = 0x8, scoped, tag = 'scoped memory for tpu_custom_call.1']
    #allocation6 [shape = 's32[2]{0}', space=sflag, size = 0x8, scoped, tag = 'scoped memory for tpu_custom_call.1']
    #allocation7 [shape = 'u8[524288]{0}', space=vmem, size = 0x80000, scoped, tag = 'input window, operand 2']
    #allocation8 [shape = 's32[2]{0}', space=sflag, size = 0x8, scoped, tag = 'scoped memory for tpu_custom_call.1']
    #allocation9 [shape = 'u8[4096]{0}', space=vmem, size = 0x1000, scoped, tag = 'input window, operand 3']
    #allocation10 [shape = 'u8[524288]{0}', space=vmem, size = 0x80000, scoped, tag = 'input window, operand 4']
    #allocation11 [shape = 's32[2]{0}', space=sflag, size = 0x8, scoped, tag = 'scoped memory for tpu_custom_call.1']
    #allocation12 [shape = 'u8[262144]{0}', space=vmem, size = 0x40000, scoped, tag = 'output window, operand 0']
    %14 = vsyncpa [#allocation5], 0
    %s15 = scalar_lea.sflag [#allocation5], 1
    %16 = vsyncpa %s15, 0
    %17 = vsyncpa [#allocation8], 0
    %s18 = scalar_lea.sflag [#allocation8], 1
    %19 = vsyncpa %s18, 0
    %20 = vsyncpa [#allocation11], 0
    %s21 = scalar_lea.sflag [#allocation11], 1
    %22 = vsyncpa %s21, 0
    %23 = vsyncpa [#allocation6], 0
    %s24 = scalar_lea.sflag [#allocation6], 1
    %25 = vsyncpa %s24, 0
    loop: start=0, step=1, limit=12
    $region2: #{tpu_custom_call.1} parent=1 // loop_pre_header
      _
    $region3: #{tpu_custom_call.1} parent=1 // loop_header
      %s27 = sphi 0, %s31
      %p28 = scmp.ge.s32.totalorder %s27, 12
      %s34 = sphi 0, %s46
      %s35 = sphi 0, %s42
      %s36 = sphi 0, %s34
      %s37 = sphi 0, %s35
      %s38 = sphi 0, %s36
      %s39 = sphi 0, %s37
      %s49 = sphi 0, %s51
      %s52 = sphi 0, %s49
      %s53 = sphi 0, %s52
      %s69 = sphi 0, %s53
      %s79 = sphi 0, %s81
      %s82 = sphi 0, %s79
      %s83 = sphi 0, %s82
      %s99 = sphi 0, %s83
      %s107 = sphi 0, %s109
      %s110 = sphi 0, %s107
      %s111 = sphi 0, %s110
      %s127 = sphi 0, %s111
      %s137 = sphi 0, %s139
      %s140 = sphi 0, %s137
      %s141 = sphi 0, %s140
      %s157 = sphi 0, %s141
      %s163 = sphi 0, %s165
      %s166 = sphi 0, %s163
      %s167 = sphi 0, %s166
      %s183 = sphi 0, %s167
    $region4: #{tpu_custom_call.1} parent=1 // loop_header_branch
      %30 = sbr.rel (%p28) target = $region8
    $region5: #{tpu_custom_call.1} parent=1 // loop_body
      %s32 = ssub.s32 %s27, 1
      %s33 = ssub.s32 %s27, 2
      %s40 = sadd.s32 1, %s35
      %p41 = scmp.ge.s32.totalorder %s40, 2
      %s42 = scalar_select %p41, 0, %s40
      %s43 = sadd.s32 1, %s34
      %s44 = scalar_select %p41, %s43, %s34
      %p45 = scmp.ge.s32.totalorder %s44, 5
      %s46 = scalar_select %p45, 0, %s44
      %s47 = ssub.s32 %s34, %s46
      %p48 = scmp.eq.s32.totalorder %s47, 0
      %s50 = sadd.s32 %s49, 1
      %s51 = scalar_select %p48, %s49, %s50
      %p54 = pneg %p48
      %p55 = scmp.eq.s32.totalorder %s27, 9
      %p56 = por %p54, %p55
      %p57 = scmp.ne.s32.totalorder %s49, %s52
      %p58 = scmp.eq.s32.totalorder %s27, 0
      %p59 = por %p57, %p58
      %p60 = scmp.ne.s32.totalorder %s49, %s52
      %p61 = scmp.eq.s32.totalorder %s32, 9
      %p62 = por %p60, %p61
      %p63 = scmp.ne.s32.totalorder %s52, %s53
      %p64 = scmp.eq.s32.totalorder %s32, 0
      %p65 = por %p63, %p64
      %p66 = scmp.ne.s32.totalorder %s52, %s53
      %p67 = scmp.eq.s32.totalorder %s33, 9
      %p68 = por %p66, %p67
      %p70 = scmp.ne.s32.totalorder %s53, %s69
      %p71 = scmp.eq.s32.totalorder %s33, 0
      %p72 = por %p70, %p71
      %s73 = sld [smem:[#allocation3 + %s34]]
      %s74 = sld [smem:[#allocation3 + %s46]]
      %s75 = ssub.s32 %s73, %s74
      %s76 = ssub.s32 %s35, %s42
      %s77 = sor.u32 %s75, %s76
      %p78 = scmp.eq.s32.totalorder %s77, 0
      %s80 = sadd.s32 %s79, 1
      %s81 = scalar_select %p78, %s79, %s80
      %p84 = pneg %p78
      %p85 = scmp.eq.s32.totalorder %s27, 9
      %p86 = por %p84, %p85
      %p87 = scmp.ne.s32.totalorder %s79, %s82
      %p88 = scmp.eq.s32.totalorder %s27, 0
      %p89 = por %p87, %p88
      %p90 = scmp.ne.s32.totalorder %s79, %s82
      %p91 = scmp.eq.s32.totalorder %s32, 9
      %p92 = por %p90, %p91
      %p93 = scmp.ne.s32.totalorder %s82, %s83
      %p94 = scmp.eq.s32.totalorder %s32, 0
      %p95 = por %p93, %p94
      %p96 = scmp.ne.s32.totalorder %s82, %s83
      %p97 = scmp.eq.s32.totalorder %s33, 9
      %p98 = por %p96, %p97
      %p100 = scmp.ne.s32.totalorder %s83, %s99
      %p101 = scmp.eq.s32.totalorder %s33, 0
      %p102 = por %p100, %p101
      %s103 = sld [smem:[#allocation3 + %s34]]
      %s104 = sld [smem:[#allocation3 + %s46]]
      %s105 = ssub.s32 %s103, %s104
      %p106 = scmp.eq.s32.totalorder %s105, 0
      %s108 = sadd.s32 %s107, 1
      %s109 = scalar_select %p106, %s107, %s108
      %p112 = pneg %p106
      %p113 = scmp.eq.s32.totalorder %s27, 9
      %p114 = por %p112, %p113
      %p115 = scmp.ne.s32.totalorder %s107, %s110
      %p116 = scmp.eq.s32.totalorder %s27, 0
      %p117 = por %p115, %p116
      %p118 = scmp.ne.s32.totalorder %s107, %s110
      %p119 = scmp.eq.s32.totalorder %s32, 9
      %p120 = por %p118, %p119
      %p121 = scmp.ne.s32.totalorder %s110, %s111
      %p122 = scmp.eq.s32.totalorder %s32, 0
      %p123 = por %p121, %p122
      %p124 = scmp.ne.s32.totalorder %s110, %s111
      %p125 = scmp.eq.s32.totalorder %s33, 9
      %p126 = por %p124, %p125
      %p128 = scmp.ne.s32.totalorder %s111, %s127
      %p129 = scmp.eq.s32.totalorder %s33, 0
      %p130 = por %p128, %p129
      %s131 = sld [smem:[#allocation3 + %s34]]
      %s132 = sld [smem:[#allocation3 + %s46]]
      %s133 = ssub.s32 %s131, %s132
      %s134 = ssub.s32 %s35, %s42
      %s135 = sor.u32 %s133, %s134
      %p136 = scmp.eq.s32.totalorder %s135, 0
      %s138 = sadd.s32 %s137, 1
      %s139 = scalar_select %p136, %s137, %s138
      %p142 = pneg %p136
      %p143 = scmp.eq.s32.totalorder %s27, 9
      %p144 = por %p142, %p143
      %p145 = scmp.ne.s32.totalorder %s137, %s140
      %p146 = scmp.eq.s32.totalorder %s27, 0
      %p147 = por %p145, %p146
      %p148 = scmp.ne.s32.totalorder %s137, %s140
      %p149 = scmp.eq.s32.totalorder %s32, 9
      %p150 = por %p148, %p149
      %p151 = scmp.ne.s32.totalorder %s140, %s141
      %p152 = scmp.eq.s32.totalorder %s32, 0
      %p153 = por %p151, %p152
      %p154 = scmp.ne.s32.totalorder %s140, %s141
      %p155 = scmp.eq.s32.totalorder %s33, 9
      %p156 = por %p154, %p155
      %p158 = scmp.ne.s32.totalorder %s141, %s157
      %p159 = scmp.eq.s32.totalorder %s33, 0
      %p160 = por %p158, %p159
      %s161 = ssub.s32 %s34, %s46
      %p162 = scmp.eq.s32.totalorder %s161, 0
      %s164 = sadd.s32 %s163, 1
      %s165 = scalar_select %p162, %s163, %s164
      %p168 = pneg %p162
      %p169 = scmp.eq.s32.totalorder %s27, 9
      %p170 = por %p168, %p169
      %p171 = scmp.ne.s32.totalorder %s163, %s166
      %p172 = scmp.eq.s32.totalorder %s27, 0
      %p173 = por %p171, %p172
      %p174 = scmp.ne.s32.totalorder %s163, %s166
      %p175 = scmp.eq.s32.totalorder %s32, 9
      %p176 = por %p174, %p175
      %p177 = scmp.ne.s32.totalorder %s166, %s167
      %p178 = scmp.eq.s32.totalorder %s32, 0
      %p179 = por %p177, %p178
      %p180 = scmp.ne.s32.totalorder %s166, %s167
      %p181 = scmp.eq.s32.totalorder %s33, 9
      %p182 = por %p180, %p181
      %p184 = scmp.ne.s32.totalorder %s167, %s183
      %p185 = scmp.eq.s32.totalorder %s33, 0
      %p186 = por %p184, %p185
      %p187 = scmp.le.s32.totalorder 1, %s27
      %p188 = scmp.lt.s32.totalorder %s27, 11
      %p189 = pnand %p187, %p188
      %p190 = pneg %p189
      // Predicated region
      $region9: #{tpu_custom_call.1} parent=5 // pred_check
        _
      $region10: #{tpu_custom_call.1} parent=5 // pred_check_branch
        %192 = sbr.rel (%p189) target = $region12
      $region11: #{tpu_custom_call.1} parent=5 // pred_region
        %s193 = ssub.s32 %s27, 1
      $region12: #{tpu_custom_call.1} parent=5 // pred_fallthru
        _
      %p194 = scmp.lt.s32.totalorder %s27, 10
      // Predicated region
      $region13: #{tpu_custom_call.1} parent=5 // pred_check
        %p195 = pneg %p194
      $region14: #{tpu_custom_call.1} parent=5 // pred_check_branch
        %197 = sbr.rel (%p195) target = $region16
      $region15: #{tpu_custom_call.1} parent=5 // pred_region
        // Predicated region
        $region17: #{tpu_custom_call.1} parent=15 // pred_check
          %p198 = pneg %p59
        $region18: #{tpu_custom_call.1} parent=15 // pred_check_branch
          %200 = sbr.rel (%p198) target = $region20
        $region19: #{tpu_custom_call.1} parent=15 // pred_region
          %s201 = sand.u32 %s49, 1
          %s202 = scalar_lea.sflag [#allocation5], %s201
          %s203 = sand.u32 %s49, 1
          %s204 = smul.addr %s203, 256
          %s205 = scalar_lea.vmem [#allocation4], %s204
          %s206 = smul.u32 16, %s34
          %s208 = ssub.s32 4096, 4096
          %209 = vsyncadd %s202, %s208
          %s210 = smul.addr %s206, 2
          %s211 = smul.addr %s210, 128
          %s212 = scalar_lea.hbm %s1, %s211
          %s213 = sshll.u32 %s205, 4
          %s214 = int_to_ptr.vmem [resolvable:$true] %s213
          %219 = dma.hbm_to_vmem [thread:$0]  %s212, 4096, %s214, %s202, 256, 256, 16
        $region20: #{tpu_custom_call.1} parent=15 // pred_fallthru
          _
        // Predicated region
        $region21: #{tpu_custom_call.1} parent=15 // pred_check
          %p220 = pneg %p89
        $region22: #{tpu_custom_call.1} parent=15 // pred_check_branch
          %222 = sbr.rel (%p220) target = $region24
        $region23: #{tpu_custom_call.1} parent=15 // pred_region
          %s223 = sand.u32 %s27, 1
          %s224 = scalar_lea.sflag [#allocation8], %s223
          %s225 = sand.u32 %s79, 1
          %s226 = smul.addr %s225, 512
          %s227 = scalar_lea.vmem [#allocation7], %s226
          %s228 = sld [smem:[#allocation3 + %s34]]
          %s229 = smul.u32 2, %s35
          %s231 = ssub.s32 8192, 8192
          %232 = vsyncadd %s224, %s231
          %s233 = smul.addr %s228, 128
          %s234 = sadd.s32 %s229, %s233
          %s235 = smul.addr %s234, 128
          %s236 = scalar_lea.hbm %s2, %s235
          %s237 = sshll.u32 %s227, 4
          %s238 = int_to_ptr.vmem [resolvable:$true] %s237
          %243 = dma.hbm_to_vmem [thread:$0]  %s236, 8192, %s238, %s224, 512, 256, 16
        $region24: #{tpu_custom_call.1} parent=15 // pred_fallthru
          _
        // Predicated region
        $region25: #{tpu_custom_call.1} parent=15 // pred_check
          %p244 = pneg %p117
        $region26: #{tpu_custom_call.1} parent=15 // pred_check_branch
          %246 = sbr.rel (%p244) target = $region28
        $region27: #{tpu_custom_call.1} parent=15 // pred_region
          %s247 = sand.u32 %s27, 1
          %s248 = scalar_lea.sflag [#allocation8], %s247
          %s249 = sand.u32 %s107, 1
          %s250 = smul.addr %s249, 4
          %s251 = scalar_lea.vmem [#allocation9], %s250
          %s252 = sld [smem:[#allocation3 + %s34]]
          %s254 = ssub.s32 64, 64
          %255 = vsyncadd %s248, %s254
          %s256 = smul.addr %s252, 4
          %s257 = smul.addr %s256, 16
          %s258 = scalar_lea.hbm %s3, %s257
          %s260 = sshll.u32 %s251, 4
          %s261 = int_to_ptr.vmem [resolvable:$true] %s260
          %263 = dma.hbm_to_vmem [thread:$0]  %s258, 64, %s261, %s248
        $region28: #{tpu_custom_call.1} parent=15 // pred_fallthru
          _
        // Predicated region
        $region29: #{tpu_custom_call.1} parent=15 // pred_check
          %p264 = pneg %p147
        $region30: #{tpu_custom_call.1} parent=15 // pred_check_branch
          %266 = sbr.rel (%p264) target = $region32
        $region31: #{tpu_custom_call.1} parent=15 // pred_region
          %s267 = sand.u32 %s137, 1
          %s268 = scalar_lea.sflag [#allocation11], %s267
          %s269 = sand.u32 %s137, 1
          %s270 = smul.addr %s269, 512
          %s271 = scalar_lea.vmem [#allocation10], %s270
          %s272 = sld [smem:[#allocation3 + %s34]]
          %s273 = smul.u32 32, %s35
          %s275 = ssub.s32 8192, 8192
          %276 = vsyncadd %s268, %s275
          %s277 = smul.addr %s273, 2
          %s278 = smul.addr %s272, 128
          %s279 = sadd.s32 %s277, %s278
          %s280 = smul.addr %s279, 128
          %s281 = scalar_lea.hbm %s4, %s280
          %s282 = sshll.u32 %s271, 4
          %s283 = int_to_ptr.vmem [resolvable:$true] %s282
          %288 = dma.hbm_to_vmem [thread:$0]  %s281, 8192, %s283, %s268, 256, 256, 16
        $region32: #{tpu_custom_call.1} parent=15 // pred_fallthru
          _
      $region16: #{tpu_custom_call.1} parent=5 // pred_fallthru
        _
      %p289 = scmp.le.s32.totalorder 1, %s27
      %p290 = scmp.lt.s32.totalorder %s27, 11
      %p291 = pnand %p289, %p290
      %p292 = pneg %p291
      // Predicated region
      $region33: #{tpu_custom_call.1} parent=5 // pred_check
        _
      $region34: #{tpu_custom_call.1} parent=5 // pred_check_branch
        %294 = sbr.rel (%p291) target = $region36
      $region35: #{tpu_custom_call.1} parent=5 // pred_region
        %s295 = ssub.s32 %s27, 1
        %s296 = sand.u32 %s52, 1
        %s297 = scalar_lea.sflag [#allocation5], %s296
        %s298 = sand.u32 %s52, 1
        %s299 = smul.addr %s298, 256
        %s300 = scalar_lea.vmem [#allocation4], %s299
        // Predicated region
        $region37: #{tpu_custom_call.1} parent=35 // pred_check
          %p301 = pneg %p65
        $region38: #{tpu_custom_call.1} parent=35 // pred_check_branch
          %303 = sbr.rel (%p301) target = $region40
        $region39: #{tpu_custom_call.1} parent=35 // pred_region
          %304 = dma.done %s297, 4096
        $region40: #{tpu_custom_call.1} parent=35 // pred_fallthru
          _
        %s305 = sand.u32 %s32, 1
        %s306 = scalar_lea.sflag [#allocation8], %s305
        %s307 = sand.u32 %s82, 1
        %s308 = smul.addr %s307, 512
        %s309 = scalar_lea.vmem [#allocation7], %s308
        // Predicated region
        $region41: #{tpu_custom_call.1} parent=35 // pred_check
          %p310 = pneg %p95
        $region42: #{tpu_custom_call.1} parent=35 // pred_check_branch
          %312 = sbr.rel (%p310) target = $region44
        $region43: #{tpu_custom_call.1} parent=35 // pred_region
          %313 = dma.done %s306, 8192
        $region44: #{tpu_custom_call.1} parent=35 // pred_fallthru
          _
        %s314 = sand.u32 %s32, 1
        %s315 = scalar_lea.sflag [#allocation8], %s314
        %s316 = sand.u32 %s110, 1
        %s317 = smul.addr %s316, 4
        %s318 = scalar_lea.vmem [#allocation9], %s317
        // Predicated region
        $region45: #{tpu_custom_call.1} parent=35 // pred_check
          %p319 = pneg %p123
        $region46: #{tpu_custom_call.1} parent=35 // pred_check_branch
          %321 = sbr.rel (%p319) target = $region48
        $region47: #{tpu_custom_call.1} parent=35 // pred_region
          %322 = dma.done %s315, 64
        $region48: #{tpu_custom_call.1} parent=35 // pred_fallthru
          _
        %s323 = sand.u32 %s140, 1
        %s324 = scalar_lea.sflag [#allocation11], %s323
        %s325 = sand.u32 %s140, 1
        %s326 = smul.addr %s325, 512
        %s327 = scalar_lea.vmem [#allocation10], %s326
        // Predicated region
        $region49: #{tpu_custom_call.1} parent=35 // pred_check
          %p328 = pneg %p153
        $region50: #{tpu_custom_call.1} parent=35 // pred_check_branch
          %330 = sbr.rel (%p328) target = $region52
        $region51: #{tpu_custom_call.1} parent=35 // pred_region
          %331 = dma.done %s324, 8192
        $region52: #{tpu_custom_call.1} parent=35 // pred_fallthru
          _
        %s332 = sand.u32 %s52, 1
        %s333 = scalar_lea.sflag [#allocation5], %s332
        %s334 = sand.u32 %s52, 1
        %s335 = smul.addr %s334, 256
        %s336 = scalar_lea.vmem [#allocation4], %s335
        %p337 = pneg %p65
        %p338 = pneg %p62
        %s339 = sand.u32 %s32, 1
        %s340 = scalar_lea.sflag [#allocation8], %s339
        %s341 = sand.u32 %s82, 1
        %s342 = smul.addr %s341, 512
        %s343 = scalar_lea.vmem [#allocation7], %s342
        %p344 = pneg %p95
        %p345 = pneg %p92
        %s346 = sand.u32 %s32, 1
        %s347 = scalar_lea.sflag [#allocation8], %s346
        %s348 = sand.u32 %s110, 1
        %s349 = smul.addr %s348, 4
        %s350 = scalar_lea.vmem [#allocation9], %s349
        %p351 = pneg %p123
        %p352 = pneg %p120
        %s353 = sand.u32 %s140, 1
        %s354 = scalar_lea.sflag [#allocation11], %s353
        %s355 = sand.u32 %s140, 1
        %s356 = smul.addr %s355, 512
        %s357 = scalar_lea.vmem [#allocation10], %s356
        %p358 = pneg %p153
        %p359 = pneg %p150
        %p360 = pneg %p179
        %p361 = pneg %p176
        %s362 = sand.u32 %s166, 1
        %s363 = scalar_lea.sflag [#allocation6], %s362
        %s364 = sand.u32 %s166, 1
        %s365 = smul.addr %s364, 256
        %s366 = scalar_lea.vmem [#allocation12], %s365
        %s367 = smul.u32 16, %s36
        %s368 = sld [smem:[#allocation3 + %s36]]
        %s369 = smul.u32 2, %s37
        %s370 = sld [smem:[#allocation3 + %s36]]
        %s371 = sld [smem:[#allocation3 + %s36]]
        %s372 = smul.u32 32, %s37
        %s373 = smul.u32 16, %s36
        %v374 = vld [vmem:[%s300] sm:$0xff]
        %v375 = vld [vmem:[%s300 + $0x8] sm:$0xff]
        %v376 = vld [vmem:[%s300 + $0x10] sm:$0xff]
        %v377 = vld [vmem:[%s300 + $0x18] sm:$0xff]
        %v378 = vld [vmem:[%s300 + $0x20] sm:$0xff]
        %v379 = vld [vmem:[%s300 + $0x28] sm:$0xff]
        %v380 = vld [vmem:[%s300 + $0x30] sm:$0xff]
        %v381 = vld [vmem:[%s300 + $0x38] sm:$0xff]
        %v382 = vld [vmem:[%s300 + $0x40] sm:$0xff]
        %v383 = vld [vmem:[%s300 + $0x48] sm:$0xff]
        %v384 = vld [vmem:[%s300 + $0x50] sm:$0xff]
        %v385 = vld [vmem:[%s300 + $0x58] sm:$0xff]
        %v386 = vld [vmem:[%s300 + $0x60] sm:$0xff]
        %v387 = vld [vmem:[%s300 + $0x68] sm:$0xff]
        %v388 = vld [vmem:[%s300 + $0x70] sm:$0xff]
        %v389 = vld [vmem:[%s300 + $0x78] sm:$0xff]
        %v390 = vld [vmem:[%s300 + $0x80] sm:$0xff]
        %v391 = vld [vmem:[%s300 + $0x88] sm:$0xff]
        %v392 = vld [vmem:[%s300 + $0x90] sm:$0xff]
        %v393 = vld [vmem:[%s300 + $0x98] sm:$0xff]
        %v394 = vld [vmem:[%s300 + $0xa0] sm:$0xff]
        %v395 = vld [vmem:[%s300 + $0xa8] sm:$0xff]
        %v396 = vld [vmem:[%s300 + $0xb0] sm:$0xff]
        %v397 = vld [vmem:[%s300 + $0xb8] sm:$0xff]
        %v398 = vld [vmem:[%s300 + $0xc0] sm:$0xff]
        %v399 = vld [vmem:[%s300 + $0xc8] sm:$0xff]
        %v400 = vld [vmem:[%s300 + $0xd0] sm:$0xff]
        %v401 = vld [vmem:[%s300 + $0xd8] sm:$0xff]
        %v402 = vld [vmem:[%s300 + $0xe0] sm:$0xff]
        %v403 = vld [vmem:[%s300 + $0xe8] sm:$0xff]
        %v404 = vld [vmem:[%s300 + $0xf0] sm:$0xff]
        %v405 = vld [vmem:[%s300 + $0xf8] sm:$0xff]
        %v406 = vld [vmem:[%s309] sm:$0xff]
        %v407 = vld [vmem:[%s309 + $0x8] sm:$0xff]
        %v408 = vld [vmem:[%s309 + $0x10] sm:$0xff]
        %v409 = vld [vmem:[%s309 + $0x18] sm:$0xff]
        %v410 = vld [vmem:[%s309 + $0x20] sm:$0xff]
        %v411 = vld [vmem:[%s309 + $0x28] sm:$0xff]
        %v412 = vld [vmem:[%s309 + $0x30] sm:$0xff]
        %v413 = vld [vmem:[%s309 + $0x38] sm:$0xff]
        %v414 = vld [vmem:[%s309 + $0x40] sm:$0xff]
        %v415 = vld [vmem:[%s309 + $0x48] sm:$0xff]
        %v416 = vld [vmem:[%s309 + $0x50] sm:$0xff]
        %v417 = vld [vmem:[%s309 + $0x58] sm:$0xff]
        %v418 = vld [vmem:[%s309 + $0x60] sm:$0xff]
        %v419 = vld [vmem:[%s309 + $0x68] sm:$0xff]
        %v420 = vld [vmem:[%s309 + $0x70] sm:$0xff]
        %v421 = vld [vmem:[%s309 + $0x78] sm:$0xff]
        %v422 = vld [vmem:[%s309 + $0x80] sm:$0xff]
        %v423 = vld [vmem:[%s309 + $0x88] sm:$0xff]
        %v424 = vld [vmem:[%s309 + $0x90] sm:$0xff]
        %v425 = vld [vmem:[%s309 + $0x98] sm:$0xff]
        %v426 = vld [vmem:[%s309 + $0xa0] sm:$0xff]
        %v427 = vld [vmem:[%s309 + $0xa8] sm:$0xff]
        %v428 = vld [vmem:[%s309 + $0xb0] sm:$0xff]
        %v429 = vld [vmem:[%s309 + $0xb8] sm:$0xff]
        %v430 = vld [vmem:[%s309 + $0xc0] sm:$0xff]
        %v431 = vld [vmem:[%s309 + $0xc8] sm:$0xff]
        %v432 = vld [vmem:[%s309 + $0xd0] sm:$0xff]
        %v433 = vld [vmem:[%s309 + $0xd8] sm:$0xff]
        %v434 = vld [vmem:[%s309 + $0xe0] sm:$0xff]
        %v435 = vld [vmem:[%s309 + $0xe8] sm:$0xff]
        %v436 = vld [vmem:[%s309 + $0xf0] sm:$0xff]
        %v437 = vld [vmem:[%s309 + $0xf8] sm:$0xff]
        %v438 = vld [vmem:[%s309 + $0x100] sm:$0xff]
        %v439 = vld [vmem:[%s309 + $0x108] sm:$0xff]
        %v440 = vld [vmem:[%s309 + $0x110] sm:$0xff]
        %v441 = vld [vmem:[%s309 + $0x118] sm:$0xff]
        %v442 = vld [vmem:[%s309 + $0x120] sm:$0xff]
        %v443 = vld [vmem:[%s309 + $0x128] sm:$0xff]
        %v444 = vld [vmem:[%s309 + $0x130] sm:$0xff]
        %v445 = vld [vmem:[%s309 + $0x138] sm:$0xff]
        %v446 = vld [vmem:[%s309 + $0x140] sm:$0xff]
        %v447 = vld [vmem:[%s309 + $0x148] sm:$0xff]
        %v448 = vld [vmem:[%s309 + $0x150] sm:$0xff]
        %v449 = vld [vmem:[%s309 + $0x158] sm:$0xff]
        %v450 = vld [vmem:[%s309 + $0x160] sm:$0xff]
        %v451 = vld [vmem:[%s309 + $0x168] sm:$0xff]
        %v452 = vld [vmem:[%s309 + $0x170] sm:$0xff]
        %v453 = vld [vmem:[%s309 + $0x178] sm:$0xff]
        %v454 = vld [vmem:[%s309 + $0x180] sm:$0xff]
        %v455 = vld [vmem:[%s309 + $0x188] sm:$0xff]
        %v456 = vld [vmem:[%s309 + $0x190] sm:$0xff]
        %v457 = vld [vmem:[%s309 + $0x198] sm:$0xff]
        %v458 = vld [vmem:[%s309 + $0x1a0] sm:$0xff]
        %v459 = vld [vmem:[%s309 + $0x1a8] sm:$0xff]
        %v460 = vld [vmem:[%s309 + $0x1b0] sm:$0xff]
        %v461 = vld [vmem:[%s309 + $0x1b8] sm:$0xff]
        %v462 = vld [vmem:[%s309 + $0x1c0] sm:$0xff]
        %v463 = vld [vmem:[%s309 + $0x1c8] sm:$0xff]
        %v464 = vld [vmem:[%s309 + $0x1d0] sm:$0xff]
        %v465 = vld [vmem:[%s309 + $0x1d8] sm:$0xff]
        %v466 = vld [vmem:[%s309 + $0x1e0] sm:$0xff]
        %v467 = vld [vmem:[%s309 + $0x1e8] sm:$0xff]
        %v468 = vld [vmem:[%s309 + $0x1f0] sm:$0xff]
        %v469 = vld [vmem:[%s309 + $0x1f8] sm:$0xff]
        %v470 = vld [vmem:[%s327] sm:$0xff]
        %v471 = vld [vmem:[%s327 + $0x8] sm:$0xff]
        %v472 = vld [vmem:[%s327 + $0x10] sm:$0xff]
        %v473 = vld [vmem:[%s327 + $0x18] sm:$0xff]
        %v474 = vld [vmem:[%s327 + $0x20] sm:$0xff]
        %v475 = vld [vmem:[%s327 + $0x28] sm:$0xff]
        %v476 = vld [vmem:[%s327 + $0x30] sm:$0xff]
        %v477 = vld [vmem:[%s327 + $0x38] sm:$0xff]
        %v478 = vld [vmem:[%s327 + $0x40] sm:$0xff]
        %v479 = vld [vmem:[%s327 + $0x48] sm:$0xff]
        %v480 = vld [vmem:[%s327 + $0x50] sm:$0xff]
        %v481 = vld [vmem:[%s327 + $0x58] sm:$0xff]
        %v482 = vld [vmem:[%s327 + $0x60] sm:$0xff]
        %v483 = vld [vmem:[%s327 + $0x68] sm:$0xff]
        %v484 = vld [vmem:[%s327 + $0x70] sm:$0xff]
        %v485 = vld [vmem:[%s327 + $0x78] sm:$0xff]
        %v486 = vld [vmem:[%s327 + $0x80] sm:$0xff]
        %v487 = vld [vmem:[%s327 + $0x88] sm:$0xff]
        %v488 = vld [vmem:[%s327 + $0x90] sm:$0xff]
        %v489 = vld [vmem:[%s327 + $0x98] sm:$0xff]
        %v490 = vld [vmem:[%s327 + $0xa0] sm:$0xff]
        %v491 = vld [vmem:[%s327 + $0xa8] sm:$0xff]
        %v492 = vld [vmem:[%s327 + $0xb0] sm:$0xff]
        %v493 = vld [vmem:[%s327 + $0xb8] sm:$0xff]
        %v494 = vld [vmem:[%s327 + $0xc0] sm:$0xff]
        %v495 = vld [vmem:[%s327 + $0xc8] sm:$0xff]
        %v496 = vld [vmem:[%s327 + $0xd0] sm:$0xff]
        %v497 = vld [vmem:[%s327 + $0xd8] sm:$0xff]
        %v498 = vld [vmem:[%s327 + $0xe0] sm:$0xff]
        %v499 = vld [vmem:[%s327 + $0xe8] sm:$0xff]
        %v500 = vld [vmem:[%s327 + $0xf0] sm:$0xff]
        %v501 = vld [vmem:[%s327 + $0xf8] sm:$0xff]
        %v502 = vld [vmem:[%s327 + $0x100] sm:$0xff]
        %v503 = vld [vmem:[%s327 + $0x108] sm:$0xff]
        %v504 = vld [vmem:[%s327 + $0x110] sm:$0xff]
        %v505 = vld [vmem:[%s327 + $0x118] sm:$0xff]
        %v506 = vld [vmem:[%s327 + $0x120] sm:$0xff]
        %v507 = vld [vmem:[%s327 + $0x128] sm:$0xff]
        %v508 = vld [vmem:[%s327 + $0x130] sm:$0xff]
        %v509 = vld [vmem:[%s327 + $0x138] sm:$0xff]
        %v510 = vld [vmem:[%s327 + $0x140] sm:$0xff]
        %v511 = vld [vmem:[%s327 + $0x148] sm:$0xff]
        %v512 = vld [vmem:[%s327 + $0x150] sm:$0xff]
        %v513 = vld [vmem:[%s327 + $0x158] sm:$0xff]
        %v514 = vld [vmem:[%s327 + $0x160] sm:$0xff]
        %v515 = vld [vmem:[%s327 + $0x168] sm:$0xff]
        %v516 = vld [vmem:[%s327 + $0x170] sm:$0xff]
        %v517 = vld [vmem:[%s327 + $0x178] sm:$0xff]
        %v518 = vld [vmem:[%s327 + $0x180] sm:$0xff]
        %v519 = vld [vmem:[%s327 + $0x188] sm:$0xff]
        %v520 = vld [vmem:[%s327 + $0x190] sm:$0xff]
        %v521 = vld [vmem:[%s327 + $0x198] sm:$0xff]
        %v522 = vld [vmem:[%s327 + $0x1a0] sm:$0xff]
        %v523 = vld [vmem:[%s327 + $0x1a8] sm:$0xff]
        %v524 = vld [vmem:[%s327 + $0x1b0] sm:$0xff]
        %v525 = vld [vmem:[%s327 + $0x1b8] sm:$0xff]
        %v526 = vld [vmem:[%s327 + $0x1c0] sm:$0xff]
        %v527 = vld [vmem:[%s327 + $0x1c8] sm:$0xff]
        %v528 = vld [vmem:[%s327 + $0x1d0] sm:$0xff]
        %v529 = vld [vmem:[%s327 + $0x1d8] sm:$0xff]
        %v530 = vld [vmem:[%s327 + $0x1e0] sm:$0xff]
        %v531 = vld [vmem:[%s327 + $0x1e8] sm:$0xff]
        %v532 = vld [vmem:[%s327 + $0x1f0] sm:$0xff]
        %v533 = vld [vmem:[%s327 + $0x1f8] sm:$0xff]
        %s534 = smul.u32 %s37, 256
        %s535 = sshra.s32 %s534, 7
        %s536 = sand.u32 %s534, 127
        %s537 = scalar_lea.vmem %s318, %s535 [#allocation9]
        %v538 = vld [vmem:[%s537] sm:$0x3]
        %v540 = vlaneseq
        %v541 = vshrl.u32 %v540, 7
        %v542 = vsub.s32 0, %v541
        %v543 = vrot.slane %v538, %v542
        %v544 = vlaneseq
        %v545 = vshrl.u32 %v544, 7
        %v546 = vsub.s32 1, %v545
        %v547 = vrot.slane %v538, %v546
        %550 = vmatprep.subr.mxu0 %v407
        %551 = vmatpush1.msra.mxu0 %v406
        %552 = vmatprep.subr.mxu0 %v409
        %553 = vmatpush1.msra.mxu0 %v408
        %554 = vmatprep.subr.mxu0 %v411
        %555 = vmatpush1.msra.mxu0 %v410
        %556 = vmatprep.subr.mxu0 %v413
        %557 = vmatpush1.msra.mxu0 %v412
        %558 = vmatprep.subr.mxu0 %v415
        %559 = vmatpush1.msra.mxu0 %v414
        %560 = vmatprep.subr.mxu0 %v417
        %561 = vmatpush1.msra.mxu0 %v416
        %562 = vmatprep.subr.mxu0 %v419
        %563 = vmatpush1.msra.mxu0 %v418
        %564 = vmatprep.subr.mxu0 %v421
        %565 = vmatpush1.msra.mxu0 %v420
        %566 = vmatprep.subr.mxu0 %v423
        %567 = vmatpush1.msra.mxu0 %v422
        %568 = vmatprep.subr.mxu0 %v425
        %569 = vmatpush1.msra.mxu0 %v424
        %570 = vmatprep.subr.mxu0 %v427
        %571 = vmatpush1.msra.mxu0 %v426
        %572 = vmatprep.subr.mxu0 %v429
        %573 = vmatpush1.msra.mxu0 %v428
        %574 = vmatprep.subr.mxu0 %v431
        %575 = vmatpush1.msra.mxu0 %v430
        %576 = vmatprep.subr.mxu0 %v433
        %577 = vmatpush1.msra.mxu0 %v432
        %578 = vmatprep.subr.mxu0 %v435
        %579 = vmatpush1.msra.mxu0 %v434
        %580 = vmatprep.subr.mxu0 %v437
        %581 = vmatpush1.msra.mxu0 %v436
        %582 = vmatprep.subr.mxu0 %v439
        %583 = vmatpush1.msra.mxu0 %v438
        %584 = vmatprep.subr.mxu0 %v441
        %585 = vmatpush1.msra.mxu0 %v440
        %586 = vmatprep.subr.mxu0 %v443
        %587 = vmatpush1.msra.mxu0 %v442
        %588 = vmatprep.subr.mxu0 %v445
        %589 = vmatpush1.msra.mxu0 %v444
        %590 = vmatprep.subr.mxu0 %v447
        %591 = vmatpush1.msra.mxu0 %v446
        %592 = vmatprep.subr.mxu0 %v449
        %593 = vmatpush1.msra.mxu0 %v448
        %594 = vmatprep.subr.mxu0 %v451
        %595 = vmatpush1.msra.mxu0 %v450
        %596 = vmatprep.subr.mxu0 %v453
        %597 = vmatpush1.msra.mxu0 %v452
        %598 = vmatprep.subr.mxu0 %v455
        %599 = vmatpush1.msra.mxu0 %v454
        %600 = vmatprep.subr.mxu0 %v457
        %601 = vmatpush1.msra.mxu0 %v456
        %602 = vmatprep.subr.mxu0 %v459
        %603 = vmatpush1.msra.mxu0 %v458
        %604 = vmatprep.subr.mxu0 %v461
        %605 = vmatpush1.msra.mxu0 %v460
        %606 = vmatprep.subr.mxu0 %v463
        %607 = vmatpush1.msra.mxu0 %v462
        %608 = vmatprep.subr.mxu0 %v465
        %609 = vmatpush1.msra.mxu0 %v464
        %610 = vmatprep.subr.mxu0 %v467
        %611 = vmatpush1.msra.mxu0 %v466
        %612 = vmatprep.subr.mxu0 %v469
        %613 = vmatpush1.msra.mxu0 %v468
        %614 = vmatprep.mubr.f32.mxu0 %v375
        %615 = vmatmul.mubr.f32.gmra.mrb[0].mxu0 %v374
        %v616 = vpop.f32.mrb[0].mxu0
        %v617 = vadd.f32 %v543, %v616
        %v618 = vpop.f32.mrb[0].mxu0
        %v619 = vadd.f32 %v547, %v618
        %620 = vmatprep.mubr.f32.mxu0 %v377
        %621 = vmatmul.mubr.f32.gmra.mrb[0].mxu0 %v376
        %v622 = vpop.f32.mrb[0].mxu0
        %v623 = vadd.f32 %v543, %v622
        %v624 = vpop.f32.mrb[0].mxu0
        %v625 = vadd.f32 %v547, %v624
        %626 = vmatprep.mubr.f32.mxu0 %v379
        %627 = vmatmul.mubr.f32.gmra.mrb[0].mxu0 %v378
        %v628 = vpop.f32.mrb[0].mxu0
        %v629 = vadd.f32 %v543, %v628
        %v630 = vpop.f32.mrb[0].mxu0
        %v631 = vadd.f32 %v547, %v630
        %632 = vmatprep.mubr.f32.mxu0 %v381
        %633 = vmatmul.mubr.f32.gmra.mrb[0].mxu0 %v380
        %v634 = vpop.f32.mrb[0].mxu0
        %v635 = vadd.f32 %v543, %v634
        %v636 = vpop.f32.mrb[0].mxu0
        %v637 = vadd.f32 %v547, %v636
        %638 = vmatprep.mubr.f32.mxu0 %v383
        %639 = vmatmul.mubr.f32.gmra.mrb[0].mxu0 %v382
        %v640 = vpop.f32.mrb[0].mxu0
        %v641 = vadd.f32 %v543, %v640
        %v642 = vpop.f32.mrb[0].mxu0
        %v643 = vadd.f32 %v547, %v642
        %644 = vmatprep.mubr.f32.mxu0 %v385
        %645 = vmatmul.mubr.f32.gmra.mrb[0].mxu0 %v384
        %v646 = vpop.f32.mrb[0].mxu0
        %v647 = vadd.f32 %v543, %v646
        %v648 = vpop.f32.mrb[0].mxu0
        %v649 = vadd.f32 %v547, %v648
        %650 = vmatprep.mubr.f32.mxu0 %v387
        %651 = vmatmul.mubr.f32.gmra.mrb[0].mxu0 %v386
        %v652 = vpop.f32.mrb[0].mxu0
        %v653 = vadd.f32 %v543, %v652
        %v654 = vpop.f32.mrb[0].mxu0
        %v655 = vadd.f32 %v547, %v654
        %656 = vmatprep.mubr.f32.mxu0 %v389
        %657 = vmatmul.mubr.f32.gmra.mrb[0].mxu0 %v388
        %v658 = vpop.f32.mrb[0].mxu0
        %v659 = vadd.f32 %v543, %v658
        %v660 = vpop.f32.mrb[0].mxu0
        %v661 = vadd.f32 %v547, %v660
        %662 = vmatprep.mubr.f32.mxu0 %v391
        %663 = vmatmul.mubr.f32.gmra.mrb[0].mxu0 %v390
        %v664 = vpop.f32.mrb[0].mxu0
        %v665 = vadd.f32 %v543, %v664
        %v666 = vpop.f32.mrb[0].mxu0
        %v667 = vadd.f32 %v547, %v666
        %668 = vmatprep.mubr.f32.mxu0 %v393
        %669 = vmatmul.mubr.f32.gmra.mrb[0].mxu0 %v392
        %v670 = vpop.f32.mrb[0].mxu0
        %v671 = vadd.f32 %v543, %v670
        %v672 = vpop.f32.mrb[0].mxu0
        %v673 = vadd.f32 %v547, %v672
        %674 = vmatprep.mubr.f32.mxu0 %v395
        %675 = vmatmul.mubr.f32.gmra.mrb[0].mxu0 %v394
        %v676 = vpop.f32.mrb[0].mxu0
        %v677 = vadd.f32 %v543, %v676
        %v678 = vpop.f32.mrb[0].mxu0
        %v679 = vadd.f32 %v547, %v678
        %680 = vmatprep.mubr.f32.mxu0 %v397
        %681 = vmatmul.mubr.f32.gmra.mrb[0].mxu0 %v396
        %v682 = vpop.f32.mrb[0].mxu0
        %v683 = vadd.f32 %v543, %v682
        %v684 = vpop.f32.mrb[0].mxu0
        %v685 = vadd.f32 %v547, %v684
        %686 = vmatprep.mubr.f32.mxu0 %v399
        %687 = vmatmul.mubr.f32.gmra.mrb[0].mxu0 %v398
        %v688 = vpop.f32.mrb[0].mxu0
        %v689 = vadd.f32 %v543, %v688
        %v690 = vpop.f32.mrb[0].mxu0
        %v691 = vadd.f32 %v547, %v690
        %692 = vmatprep.mubr.f32.mxu0 %v401
        %693 = vmatmul.mubr.f32.gmra.mrb[0].mxu0 %v400
        %v694 = vpop.f32.mrb[0].mxu0
        %v695 = vadd.f32 %v543, %v694
        %v696 = vpop.f32.mrb[0].mxu0
        %v697 = vadd.f32 %v547, %v696
        %698 = vmatprep.mubr.f32.mxu0 %v403
        %699 = vmatmul.mubr.f32.gmra.mrb[0].mxu0 %v402
        %v700 = vpop.f32.mrb[0].mxu0
        %v701 = vadd.f32 %v543, %v700
        %v702 = vpop.f32.mrb[0].mxu0
        %v703 = vadd.f32 %v547, %v702
        %704 = vmatprep.mubr.f32.mxu0 %v405
        %705 = vmatmul.mubr.f32.gmra.mrb[0].mxu0 %v404
        %v706 = vpop.f32.mrb[0].mxu0
        %v707 = vadd.f32 %v543, %v706
        %v708 = vpop.f32.mrb[0].mxu0
        %v709 = vadd.f32 %v547, %v708
        %710 = vdwg.mxu0
        %v711 = vmax.f32 %v617, 0.0
        %v712 = vmax.f32 %v619, 0.0
        %v713 = vmax.f32 %v623, 0.0
        %v714 = vmax.f32 %v625, 0.0
        %v715 = vmax.f32 %v629, 0.0
        %v716 = vmax.f32 %v631, 0.0
        %v717 = vmax.f32 %v635, 0.0
        %v718 = vmax.f32 %v637, 0.0
        %v719 = vmax.f32 %v641, 0.0
        %v720 = vmax.f32 %v643, 0.0
        %v721 = vmax.f32 %v647, 0.0
        %v722 = vmax.f32 %v649, 0.0
        %v723 = vmax.f32 %v653, 0.0
        %v724 = vmax.f32 %v655, 0.0
        %v725 = vmax.f32 %v659, 0.0
        %v726 = vmax.f32 %v661, 0.0
        %v727 = vmax.f32 %v665, 0.0
        %v728 = vmax.f32 %v667, 0.0
        %v729 = vmax.f32 %v671, 0.0
        %v730 = vmax.f32 %v673, 0.0
        %v731 = vmax.f32 %v677, 0.0
        %v732 = vmax.f32 %v679, 0.0
        %v733 = vmax.f32 %v683, 0.0
        %v734 = vmax.f32 %v685, 0.0
        %v735 = vmax.f32 %v689, 0.0
        %v736 = vmax.f32 %v691, 0.0
        %v737 = vmax.f32 %v695, 0.0
        %v738 = vmax.f32 %v697, 0.0
        %v739 = vmax.f32 %v701, 0.0
        %v740 = vmax.f32 %v703, 0.0
        %v741 = vmax.f32 %v707, 0.0
        %v742 = vmax.f32 %v709, 0.0
        %v743 = vmin.f32 %v711, 6.0
        %v744 = vmin.f32 %v712, 6.0
        %v745 = vmin.f32 %v713, 6.0
        %v746 = vmin.f32 %v714, 6.0
        %v747 = vmin.f32 %v715, 6.0
        %v748 = vmin.f32 %v716, 6.0
        %v749 = vmin.f32 %v717, 6.0
        %v750 = vmin.f32 %v718, 6.0
        %v751 = vmin.f32 %v719, 6.0
        %v752 = vmin.f32 %v720, 6.0
        %v753 = vmin.f32 %v721, 6.0
        %v754 = vmin.f32 %v722, 6.0
        %v755 = vmin.f32 %v723, 6.0
        %v756 = vmin.f32 %v724, 6.0
        %v757 = vmin.f32 %v725, 6.0
        %v758 = vmin.f32 %v726, 6.0
        %v759 = vmin.f32 %v727, 6.0
        %v760 = vmin.f32 %v728, 6.0
        %v761 = vmin.f32 %v729, 6.0
        %v762 = vmin.f32 %v730, 6.0
        %v763 = vmin.f32 %v731, 6.0
        %v764 = vmin.f32 %v732, 6.0
        %v765 = vmin.f32 %v733, 6.0
        %v766 = vmin.f32 %v734, 6.0
        %v767 = vmin.f32 %v735, 6.0
        %v768 = vmin.f32 %v736, 6.0
        %v769 = vmin.f32 %v737, 6.0
        %v770 = vmin.f32 %v738, 6.0
        %v771 = vmin.f32 %v739, 6.0
        %v772 = vmin.f32 %v740, 6.0
        %v773 = vmin.f32 %v741, 6.0
        %v774 = vmin.f32 %v742, 6.0
        %775 = vmatprep.subr.mxu0 %v471
        %776 = vmatpush1.msra.mxu0 %v470
        %777 = vmatprep.subr.mxu0 %v473
        %778 = vmatpush1.msra.mxu0 %v472
        %779 = vmatprep.subr.mxu0 %v475
        %780 = vmatpush1.msra.mxu0 %v474
        %781 = vmatprep.subr.mxu0 %v477
        %782 = vmatpush1.msra.mxu0 %v476
        %783 = vmatprep.subr.mxu0 %v479
        %784 = vmatpush1.msra.mxu0 %v478
        %785 = vmatprep.subr.mxu0 %v481
        %786 = vmatpush1.msra.mxu0 %v480
        %787 = vmatprep.subr.mxu0 %v483
        %788 = vmatpush1.msra.mxu0 %v482
        %789 = vmatprep.subr.mxu0 %v485
        %790 = vmatpush1.msra.mxu0 %v484
        %791 = vmatprep.subr.mxu0 %v487
        %792 = vmatpush1.msra.mxu0 %v486
        %793 = vmatprep.subr.mxu0 %v489
        %794 = vmatpush1.msra.mxu0 %v488
        %795 = vmatprep.subr.mxu0 %v491
        %796 = vmatpush1.msra.mxu0 %v490
        %797 = vmatprep.subr.mxu0 %v493
        %798 = vmatpush1.msra.mxu0 %v492
        %799 = vmatprep.subr.mxu0 %v495
        %800 = vmatpush1.msra.mxu0 %v494
        %801 = vmatprep.subr.mxu0 %v497
        %802 = vmatpush1.msra.mxu0 %v496
        %803 = vmatprep.subr.mxu0 %v499
        %804 = vmatpush1.msra.mxu0 %v498
        %805 = vmatprep.subr.mxu0 %v501
        %806 = vmatpush1.msra.mxu0 %v500
        %807 = vmatprep.subr.mxu0 %v503
        %808 = vmatpush1.msra.mxu0 %v502
        %809 = vmatprep.subr.mxu0 %v505
        %810 = vmatpush1.msra.mxu0 %v504
        %811 = vmatprep.subr.mxu0 %v507
        %812 = vmatpush1.msra.mxu0 %v506
        %813 = vmatprep.subr.mxu0 %v509
        %814 = vmatpush1.msra.mxu0 %v508
        %815 = vmatprep.subr.mxu0 %v511
        %816 = vmatpush1.msra.mxu0 %v510
        %817 = vmatprep.subr.mxu0 %v513
        %818 = vmatpush1.msra.mxu0 %v512
        %819 = vmatprep.subr.mxu0 %v515
        %820 = vmatpush1.msra.mxu0 %v514
        %821 = vmatprep.subr.mxu0 %v517
        %822 = vmatpush1.msra.mxu0 %v516
        %823 = vmatprep.subr.mxu0 %v519
        %824 = vmatpush1.msra.mxu0 %v518
        %825 = vmatprep.subr.mxu0 %v521
        %826 = vmatpush1.msra.mxu0 %v520
        %827 = vmatprep.subr.mxu0 %v523
        %828 = vmatpush1.msra.mxu0 %v522
        %829 = vmatprep.subr.mxu0 %v525
        %830 = vmatpush1.msra.mxu0 %v524
        %831 = vmatprep.subr.mxu0 %v527
        %832 = vmatpush1.msra.mxu0 %v526
        %833 = vmatprep.subr.mxu0 %v529
        %834 = vmatpush1.msra.mxu0 %v528
        %835 = vmatprep.subr.mxu0 %v531
        %836 = vmatpush1.msra.mxu0 %v530
        %837 = vmatprep.subr.mxu0 %v533
        %838 = vmatpush1.msra.mxu0 %v532
        %839 = vmatprep.mubr.f32.mxu0 %v744
        %840 = vmatmul.mubr.f32.gmra.mrb[0].mxu0 %v743
        %v841 = vpop.f32.mrb[0].mxu0
        %v842 = vadd.f32 0.0, %v841
        %v843 = vpop.f32.mrb[0].mxu0
        %v844 = vadd.f32 0.0, %v843
        %845 = vmatprep.mubr.f32.mxu0 %v746
        %846 = vmatmul.mubr.f32.gmra.mrb[0].mxu0 %v745
        %v847 = vpop.f32.mrb[0].mxu0
        %v848 = vadd.f32 0.0, %v847
        %v849 = vpop.f32.mrb[0].mxu0
        %v850 = vadd.f32 0.0, %v849
        %851 = vmatprep.mubr.f32.mxu0 %v748
        %852 = vmatmul.mubr.f32.gmra.mrb[0].mxu0 %v747
        %v853 = vpop.f32.mrb[0].mxu0
        %v854 = vadd.f32 0.0, %v853
        %v855 = vpop.f32.mrb[0].mxu0
        %v856 = vadd.f32 0.0, %v855
        %857 = vmatprep.mubr.f32.mxu0 %v750
        %858 = vmatmul.mubr.f32.gmra.mrb[0].mxu0 %v749
        %v859 = vpop.f32.mrb[0].mxu0
        %v860 = vadd.f32 0.0, %v859
        %v861 = vpop.f32.mrb[0].mxu0
        %v862 = vadd.f32 0.0, %v861
        %863 = vmatprep.mubr.f32.mxu0 %v752
        %864 = vmatmul.mubr.f32.gmra.mrb[0].mxu0 %v751
        %v865 = vpop.f32.mrb[0].mxu0
        %v866 = vadd.f32 0.0, %v865
        %v867 = vpop.f32.mrb[0].mxu0
        %v868 = vadd.f32 0.0, %v867
        %869 = vmatprep.mubr.f32.mxu0 %v754
        %870 = vmatmul.mubr.f32.gmra.mrb[0].mxu0 %v753
        %v871 = vpop.f32.mrb[0].mxu0
        %v872 = vadd.f32 0.0, %v871
        %v873 = vpop.f32.mrb[0].mxu0
        %v874 = vadd.f32 0.0, %v873
        %875 = vmatprep.mubr.f32.mxu0 %v756
        %876 = vmatmul.mubr.f32.gmra.mrb[0].mxu0 %v755
        %v877 = vpop.f32.mrb[0].mxu0
        %v878 = vadd.f32 0.0, %v877
        %v879 = vpop.f32.mrb[0].mxu0
        %v880 = vadd.f32 0.0, %v879
        %881 = vmatprep.mubr.f32.mxu0 %v758
        %882 = vmatmul.mubr.f32.gmra.mrb[0].mxu0 %v757
        %v883 = vpop.f32.mrb[0].mxu0
        %v884 = vadd.f32 0.0, %v883
        %v885 = vpop.f32.mrb[0].mxu0
        %v886 = vadd.f32 0.0, %v885
        %887 = vmatprep.mubr.f32.mxu0 %v760
        %888 = vmatmul.mubr.f32.gmra.mrb[0].mxu0 %v759
        %v889 = vpop.f32.mrb[0].mxu0
        %v890 = vadd.f32 0.0, %v889
        %v891 = vpop.f32.mrb[0].mxu0
        %v892 = vadd.f32 0.0, %v891
        %893 = vmatprep.mubr.f32.mxu0 %v762
        %894 = vmatmul.mubr.f32.gmra.mrb[0].mxu0 %v761
        %v895 = vpop.f32.mrb[0].mxu0
        %v896 = vadd.f32 0.0, %v895
        %v897 = vpop.f32.mrb[0].mxu0
        %v898 = vadd.f32 0.0, %v897
        %899 = vmatprep.mubr.f32.mxu0 %v764
        %900 = vmatmul.mubr.f32.gmra.mrb[0].mxu0 %v763
        %v901 = vpop.f32.mrb[0].mxu0
        %v902 = vadd.f32 0.0, %v901
        %v903 = vpop.f32.mrb[0].mxu0
        %v904 = vadd.f32 0.0, %v903
        %905 = vmatprep.mubr.f32.mxu0 %v766
        %906 = vmatmul.mubr.f32.gmra.mrb[0].mxu0 %v765
        %v907 = vpop.f32.mrb[0].mxu0
        %v908 = vadd.f32 0.0, %v907
        %v909 = vpop.f32.mrb[0].mxu0
        %v910 = vadd.f32 0.0, %v909
        %911 = vmatprep.mubr.f32.mxu0 %v768
        %912 = vmatmul.mubr.f32.gmra.mrb[0].mxu0 %v767
        %v913 = vpop.f32.mrb[0].mxu0
        %v914 = vadd.f32 0.0, %v913
        %v915 = vpop.f32.mrb[0].mxu0
        %v916 = vadd.f32 0.0, %v915
        %917 = vmatprep.mubr.f32.mxu0 %v770
        %918 = vmatmul.mubr.f32.gmra.mrb[0].mxu0 %v769
        %v919 = vpop.f32.mrb[0].mxu0
        %v920 = vadd.f32 0.0, %v919
        %v921 = vpop.f32.mrb[0].mxu0
        %v922 = vadd.f32 0.0, %v921
        %923 = vmatprep.mubr.f32.mxu0 %v772
        %924 = vmatmul.mubr.f32.gmra.mrb[0].mxu0 %v771
        %v925 = vpop.f32.mrb[0].mxu0
        %v926 = vadd.f32 0.0, %v925
        %v927 = vpop.f32.mrb[0].mxu0
        %v928 = vadd.f32 0.0, %v927
        %929 = vmatprep.mubr.f32.mxu0 %v774
        %930 = vmatmul.mubr.f32.gmra.mrb[0].mxu0 %v773
        %v931 = vpop.f32.mrb[0].mxu0
        %v932 = vadd.f32 0.0, %v931
        %v933 = vpop.f32.mrb[0].mxu0
        %v934 = vadd.f32 0.0, %v933
        %935 = vdwg.mxu0
        %p936 = scmp.eq.s32.totalorder %s37, 0
        // Predicated region
        $region53: #{tpu_custom_call.1} parent=35 // pred_check
          %p937 = pneg %p936
        $region54: #{tpu_custom_call.1} parent=35 // pred_check_branch
          %939 = sbr.rel (%p937) target = $region56
        $region55: #{tpu_custom_call.1} parent=35 // pred_region
          %940 = vst [vmem:[%s366] sm:$0xff] %v842
          %941 = vst [vmem:[%s366 + $0x8] sm:$0xff] %v844
          %942 = vst [vmem:[%s366 + $0x10] sm:$0xff] %v848
          %943 = vst [vmem:[%s366 + $0x18] sm:$0xff] %v850
          %944 = vst [vmem:[%s366 + $0x20] sm:$0xff] %v854
          %945 = vst [vmem:[%s366 + $0x28] sm:$0xff] %v856
          %946 = vst [vmem:[%s366 + $0x30] sm:$0xff] %v860
          %947 = vst [vmem:[%s366 + $0x38] sm:$0xff] %v862
          %948 = vst [vmem:[%s366 + $0x40] sm:$0xff] %v866
          %949 = vst [vmem:[%s366 + $0x48] sm:$0xff] %v868
          %950 = vst [vmem:[%s366 + $0x50] sm:$0xff] %v872
          %951 = vst [vmem:[%s366 + $0x58] sm:$0xff] %v874
          %952 = vst [vmem:[%s366 + $0x60] sm:$0xff] %v878
          %953 = vst [vmem:[%s366 + $0x68] sm:$0xff] %v880
          %954 = vst [vmem:[%s366 + $0x70] sm:$0xff] %v884
          %955 = vst [vmem:[%s366 + $0x78] sm:$0xff] %v886
          %956 = vst [vmem:[%s366 + $0x80] sm:$0xff] %v890
          %957 = vst [vmem:[%s366 + $0x88] sm:$0xff] %v892
          %958 = vst [vmem:[%s366 + $0x90] sm:$0xff] %v896
          %959 = vst [vmem:[%s366 + $0x98] sm:$0xff] %v898
          %960 = vst [vmem:[%s366 + $0xa0] sm:$0xff] %v902
          %961 = vst [vmem:[%s366 + $0xa8] sm:$0xff] %v904
          %962 = vst [vmem:[%s366 + $0xb0] sm:$0xff] %v908
          %963 = vst [vmem:[%s366 + $0xb8] sm:$0xff] %v910
          %964 = vst [vmem:[%s366 + $0xc0] sm:$0xff] %v914
          %965 = vst [vmem:[%s366 + $0xc8] sm:$0xff] %v916
          %966 = vst [vmem:[%s366 + $0xd0] sm:$0xff] %v920
          %967 = vst [vmem:[%s366 + $0xd8] sm:$0xff] %v922
          %968 = vst [vmem:[%s366 + $0xe0] sm:$0xff] %v926
          %969 = vst [vmem:[%s366 + $0xe8] sm:$0xff] %v928
          %970 = vst [vmem:[%s366 + $0xf0] sm:$0xff] %v932
          %971 = vst [vmem:[%s366 + $0xf8] sm:$0xff] %v934
        $region56: #{tpu_custom_call.1} parent=35 // pred_fallthru
          _
        %p972 = scmp.gt.s32.totalorder %s37, 0
        // Predicated region
        $region57: #{tpu_custom_call.1} parent=35 // pred_check
          %p973 = pneg %p972
        $region58: #{tpu_custom_call.1} parent=35 // pred_check_branch
          %975 = sbr.rel (%p973) target = $region60
        $region59: #{tpu_custom_call.1} parent=35 // pred_region
          %v976 = vld [vmem:[%s366] sm:$0xff]
          %v977 = vld [vmem:[%s366 + $0x8] sm:$0xff]
          %v978 = vld [vmem:[%s366 + $0x10] sm:$0xff]
          %v979 = vld [vmem:[%s366 + $0x18] sm:$0xff]
          %v980 = vld [vmem:[%s366 + $0x20] sm:$0xff]
          %v981 = vld [vmem:[%s366 + $0x28] sm:$0xff]
          %v982 = vld [vmem:[%s366 + $0x30] sm:$0xff]
          %v983 = vld [vmem:[%s366 + $0x38] sm:$0xff]
          %v984 = vld [vmem:[%s366 + $0x40] sm:$0xff]
          %v985 = vld [vmem:[%s366 + $0x48] sm:$0xff]
          %v986 = vld [vmem:[%s366 + $0x50] sm:$0xff]
          %v987 = vld [vmem:[%s366 + $0x58] sm:$0xff]
          %v988 = vld [vmem:[%s366 + $0x60] sm:$0xff]
          %v989 = vld [vmem:[%s366 + $0x68] sm:$0xff]
          %v990 = vld [vmem:[%s366 + $0x70] sm:$0xff]
          %v991 = vld [vmem:[%s366 + $0x78] sm:$0xff]
          %v992 = vld [vmem:[%s366 + $0x80] sm:$0xff]
          %v993 = vld [vmem:[%s366 + $0x88] sm:$0xff]
          %v994 = vld [vmem:[%s366 + $0x90] sm:$0xff]
          %v995 = vld [vmem:[%s366 + $0x98] sm:$0xff]
          %v996 = vld [vmem:[%s366 + $0xa0] sm:$0xff]
          %v997 = vld [vmem:[%s366 + $0xa8] sm:$0xff]
          %v998 = vld [vmem:[%s366 + $0xb0] sm:$0xff]
          %v999 = vld [vmem:[%s366 + $0xb8] sm:$0xff]
          %v1000 = vld [vmem:[%s366 + $0xc0] sm:$0xff]
          %v1001 = vld [vmem:[%s366 + $0xc8] sm:$0xff]
          %v1002 = vld [vmem:[%s366 + $0xd0] sm:$0xff]
          %v1003 = vld [vmem:[%s366 + $0xd8] sm:$0xff]
          %v1004 = vld [vmem:[%s366 + $0xe0] sm:$0xff]
          %v1005 = vld [vmem:[%s366 + $0xe8] sm:$0xff]
          %v1006 = vld [vmem:[%s366 + $0xf0] sm:$0xff]
          %v1007 = vld [vmem:[%s366 + $0xf8] sm:$0xff]
          %v1008 = vadd.f32 %v976, %v842
          %v1009 = vadd.f32 %v977, %v844
          %v1010 = vadd.f32 %v978, %v848
          %v1011 = vadd.f32 %v979, %v850
          %v1012 = vadd.f32 %v980, %v854
          %v1013 = vadd.f32 %v981, %v856
          %v1014 = vadd.f32 %v982, %v860
          %v1015 = vadd.f32 %v983, %v862
          %v1016 = vadd.f32 %v984, %v866
          %v1017 = vadd.f32 %v985, %v868
          %v1018 = vadd.f32 %v986, %v872
          %v1019 = vadd.f32 %v987, %v874
          %v1020 = vadd.f32 %v988, %v878
          %v1021 = vadd.f32 %v989, %v880
          %v1022 = vadd.f32 %v990, %v884
          %v1023 = vadd.f32 %v991, %v886
          %v1024 = vadd.f32 %v992, %v890
          %v1025 = vadd.f32 %v993, %v892
          %v1026 = vadd.f32 %v994, %v896
          %v1027 = vadd.f32 %v995, %v898
          %v1028 = vadd.f32 %v996, %v902
          %v1029 = vadd.f32 %v997, %v904
          %v1030 = vadd.f32 %v998, %v908
          %v1031 = vadd.f32 %v999, %v910
          %v1032 = vadd.f32 %v1000, %v914
          %v1033 = vadd.f32 %v1001, %v916
          %v1034 = vadd.f32 %v1002, %v920
          %v1035 = vadd.f32 %v1003, %v922
          %v1036 = vadd.f32 %v1004, %v926
          %v1037 = vadd.f32 %v1005, %v928
          %v1038 = vadd.f32 %v1006, %v932
          %v1039 = vadd.f32 %v1007, %v934
          %1040 = vst [vmem:[%s366] sm:$0xff] %v1008
          %1041 = vst [vmem:[%s366 + $0x8] sm:$0xff] %v1009
          %1042 = vst [vmem:[%s366 + $0x10] sm:$0xff] %v1010
          %1043 = vst [vmem:[%s366 + $0x18] sm:$0xff] %v1011
          %1044 = vst [vmem:[%s366 + $0x20] sm:$0xff] %v1012
          %1045 = vst [vmem:[%s366 + $0x28] sm:$0xff] %v1013
          %1046 = vst [vmem:[%s366 + $0x30] sm:$0xff] %v1014
          %1047 = vst [vmem:[%s366 + $0x38] sm:$0xff] %v1015
          %1048 = vst [vmem:[%s366 + $0x40] sm:$0xff] %v1016
          %1049 = vst [vmem:[%s366 + $0x48] sm:$0xff] %v1017
          %1050 = vst [vmem:[%s366 + $0x50] sm:$0xff] %v1018
          %1051 = vst [vmem:[%s366 + $0x58] sm:$0xff] %v1019
          %1052 = vst [vmem:[%s366 + $0x60] sm:$0xff] %v1020
          %1053 = vst [vmem:[%s366 + $0x68] sm:$0xff] %v1021
          %1054 = vst [vmem:[%s366 + $0x70] sm:$0xff] %v1022
          %1055 = vst [vmem:[%s366 + $0x78] sm:$0xff] %v1023
          %1056 = vst [vmem:[%s366 + $0x80] sm:$0xff] %v1024
          %1057 = vst [vmem:[%s366 + $0x88] sm:$0xff] %v1025
          %1058 = vst [vmem:[%s366 + $0x90] sm:$0xff] %v1026
          %1059 = vst [vmem:[%s366 + $0x98] sm:$0xff] %v1027
          %1060 = vst [vmem:[%s366 + $0xa0] sm:$0xff] %v1028
          %1061 = vst [vmem:[%s366 + $0xa8] sm:$0xff] %v1029
          %1062 = vst [vmem:[%s366 + $0xb0] sm:$0xff] %v1030
          %1063 = vst [vmem:[%s366 + $0xb8] sm:$0xff] %v1031
          %1064 = vst [vmem:[%s366 + $0xc0] sm:$0xff] %v1032
          %1065 = vst [vmem:[%s366 + $0xc8] sm:$0xff] %v1033
          %1066 = vst [vmem:[%s366 + $0xd0] sm:$0xff] %v1034
          %1067 = vst [vmem:[%s366 + $0xd8] sm:$0xff] %v1035
          %1068 = vst [vmem:[%s366 + $0xe0] sm:$0xff] %v1036
          %1069 = vst [vmem:[%s366 + $0xe8] sm:$0xff] %v1037
          %1070 = vst [vmem:[%s366 + $0xf0] sm:$0xff] %v1038
          %1071 = vst [vmem:[%s366 + $0xf8] sm:$0xff] %v1039
        $region60: #{tpu_custom_call.1} parent=35 // pred_fallthru
          _
        %s1072 = sand.u32 %s166, 1
        %s1073 = scalar_lea.sflag [#allocation6], %s1072
        %s1074 = sand.u32 %s166, 1
        %s1075 = smul.addr %s1074, 256
        %s1076 = scalar_lea.vmem [#allocation12], %s1075
        // Predicated region
        $region61: #{tpu_custom_call.1} parent=35 // pred_check
          %p1077 = pneg %p176
        $region62: #{tpu_custom_call.1} parent=35 // pred_check_branch
          %1079 = sbr.rel (%p1077) target = $region64
        $region63: #{tpu_custom_call.1} parent=35 // pred_region
          %s1080 = smul.u32 16, %s36
          %s1082 = ssub.s32 4096, 4096
          %1083 = vsyncadd %s1073, %s1082
          %s1084 = smul.addr %s1080, 2
          %s1085 = smul.addr %s1084, 128
          %s1086 = scalar_lea.hbm %s5, %s1085
          %s1087 = sshll.u32 %s1076, 4
          %s1088 = int_to_ptr.vmem [resolvable:$true] %s1087
          %1093 = dma.vmem_to_hbm [thread:$0]  %s1088, 4096, %s1086, %s1073, 256, 256, 16
        $region64: #{tpu_custom_call.1} parent=35 // pred_fallthru
          _
      $region36: #{tpu_custom_call.1} parent=5 // pred_fallthru
        _
      %p1094 = scmp.le.s32.totalorder 2, %s27
      // Predicated region
      $region65: #{tpu_custom_call.1} parent=5 // pred_check
        %p1095 = pneg %p1094
      $region66: #{tpu_custom_call.1} parent=5 // pred_check_branch
        %1097 = sbr.rel (%p1095) target = $region68
      $region67: #{tpu_custom_call.1} parent=5 // pred_region
        %s1098 = ssub.s32 %s27, 2
        // Predicated region
        $region69: #{tpu_custom_call.1} parent=67 // pred_check
          %p1099 = pneg %p182
        $region70: #{tpu_custom_call.1} parent=67 // pred_check_branch
          %1101 = sbr.rel (%p1099) target = $region72
        $region71: #{tpu_custom_call.1} parent=67 // pred_region
          %s1102 = sand.u32 %s167, 1
          %s1103 = scalar_lea.sflag [#allocation6], %s1102
          %s1104 = sand.u32 %s167, 1
          %s1105 = smul.addr %s1104, 256
          %s1106 = scalar_lea.vmem [#allocation12], %s1105
          %1107 = dma.done %s1103, 4096
        $region72: #{tpu_custom_call.1} parent=67 // pred_fallthru
          _
      $region68: #{tpu_custom_call.1} parent=5 // pred_fallthru
        _
    $region6: #{tpu_custom_call.1} parent=1 // loop_footer
      %s31 = sadd.s32 1, %s27
    $region7: #{tpu_custom_call.1} parent=1 // loop_footer_branch
      %26 = sbr.rel target = $region3
    $region8: #{tpu_custom_call.1} parent=1 // loop_exit
      _
    %1108 = vsyncpa [#allocation5], 1
    %s1109 = scalar_lea.sflag [#allocation5], 1
    %1110 = vsyncpa %s1109, 1
    %1111 = vsyncpa [#allocation8], 1
    %s1112 = scalar_lea.sflag [#allocation8], 1
    %1113 = vsyncpa %s1112, 1
    %1114 = vsyncpa [#allocation11], 1
    %s1115 = scalar_lea.sflag [#allocation11], 1
    %1116 = vsyncpa %s1115, 1
    %1117 = vsyncpa [#allocation6], 1
    %s1118 = scalar_lea.sflag [#allocation6], 1
    %1119 = vsyncpa %s1118, 1

</llo_original>
